<compile_context>
chip_gen: v7x
topology: tpu7x:2x2x1
jax: 0.10.0
libtpu: 0.0.40
codegen_flags: <defaults>
</compile_context>

<pallas_src>
import functools

import jax
import jax.numpy as jnp
from jax.experimental import pallas as pl
from jax.experimental.pallas import tpu as pltpu

_LANE = 128      # lane width (last dim of every block)
_SUB = 8         # sublane quantum (second-to-last block dim must be a multiple)
_TR_MAX = 1024   # rows per block: 4*1024*128*4B = 2 MiB per input block
_SMALL_N = 2048  # below this, a fused XLA elementwise graph beats a pallas_call


def _cdiv(a, b):
    return -(-a // b)


def _round_up(a, b):
    return _cdiv(a, b) * b


def _iou_loss_kernel(pred_ref, target_ref, loss_ref, *, loss_type):
    # pred_ref/target_ref: (4, TR, 128) planar tiles; loss_ref: (TR, 128).
    # Indexing the leading axis gives dense (TR, 128) slabs -> pure VPU work,
    # no cross-sublane selects.
    p_cx, p_cy, p_w, p_h = pred_ref[0], pred_ref[1], pred_ref[2], pred_ref[3]
    t_cx, t_cy, t_w, t_h = target_ref[0], target_ref[1], target_ref[2], target_ref[3]

    # Shared corner terms (reused by the giou branch -- computed once).
    p_x0 = p_cx - p_w * 0.5
    p_x1 = p_cx + p_w * 0.5
    p_y0 = p_cy - p_h * 0.5
    p_y1 = p_cy + p_h * 0.5
    t_x0 = t_cx - t_w * 0.5
    t_x1 = t_cx + t_w * 0.5
    t_y0 = t_cy - t_h * 0.5
    t_y1 = t_cy + t_h * 0.5

    tl_x = jnp.maximum(p_x0, t_x0)
    tl_y = jnp.maximum(p_y0, t_y0)
    br_x = jnp.minimum(p_x1, t_x1)
    br_y = jnp.minimum(p_y1, t_y1)

    area_p = p_w * p_h
    area_g = t_w * t_h

    en = ((tl_x < br_x) & (tl_y < br_y)).astype(area_p.dtype)
    area_i = (br_x - tl_x) * (br_y - tl_y) * en
    area_u = area_p + area_g - area_i
    # Exact divide (not pl.reciprocal(approx=True)) so results stay within the
    # 1e-5 tolerance of the reference; the kernel is HBM-bound so the extra
    # VALU work is hidden anyway.
    iou = area_i / (area_u + 1e-16)

    if loss_type == "iou":
        loss = 1.0 - iou * iou
    elif loss_type == "giou":
        c_w = jnp.maximum(p_x1, t_x1) - jnp.minimum(p_x0, t_x0)
        c_h = jnp.maximum(p_y1, t_y1) - jnp.minimum(p_y0, t_y0)
        area_c = c_w * c_h
        giou = iou - (area_c - area_u) / jnp.maximum(area_c, 1e-16)
        loss = 1.0 - jnp.clip(giou, -1.0, 1.0)
    else:
        raise ValueError(f"unknown loss_type {loss_type}")

    loss_ref[...] = loss


def _iou_loss_ref(pred, target, reduction="none", loss_type="iou"):
    """Pure-JAX reference mirroring the PyTorch code (also the small-N path)."""
    pred = pred.reshape(-1, 4).astype(jnp.float32)
    target = target.reshape(-1, 4).astype(jnp.float32)
    tl = jnp.maximum(pred[:, :2] - pred[:, 2:] / 2, target[:, :2] - target[:, 2:] / 2)
    br = jnp.minimum(pred[:, :2] + pred[:, 2:] / 2, target[:, :2] + target[:, 2:] / 2)
    area_p = jnp.prod(pred[:, 2:], axis=1)
    area_g = jnp.prod(target[:, 2:], axis=1)
    en = jnp.prod((tl < br).astype(jnp.float32), axis=1)
    area_i = jnp.prod(br - tl, axis=1) * en
    area_u = area_p + area_g - area_i
    iou = area_i / (area_u + 1e-16)
    if loss_type == "iou":
        loss = 1 - iou ** 2
    elif loss_type == "giou":
        c_tl = jnp.minimum(pred[:, :2] - pred[:, 2:] / 2, target[:, :2] - target[:, 2:] / 2)
        c_br = jnp.maximum(pred[:, :2] + pred[:, 2:] / 2, target[:, :2] + target[:, 2:] / 2)
        area_c = jnp.prod(c_br - c_tl, axis=1)
        giou = iou - (area_c - area_u) / jnp.maximum(area_c, 1e-16)
        loss = 1 - jnp.clip(giou, -1.0, 1.0)
    else:
        raise ValueError(f"unknown loss_type {loss_type}")
    if reduction == "mean":
        loss = loss.mean()
    elif reduction == "sum":
        loss = loss.sum()
    return loss


def iou_loss(pred, target, *, reduction="none", loss_type="iou"):
    """JAX/Pallas equivalent of YOLOX IOUloss.forward."""
    assert pred.shape[0] == target.shape[0]
    pred = pred.reshape(-1, 4).astype(jnp.float32)
    target = target.reshape(-1, 4).astype(jnp.float32)
    n = pred.shape[0]

    # Small-N fast path: kernel launch + layout plumbing dominate below a few
    # thousand boxes; a fused XLA elementwise graph is strictly faster there.
    if n < _SMALL_N:
        return _iou_loss_ref(pred, target, reduction=reduction, loss_type=loss_type)

    # Tiling: big sublane/lane-dense blocks; keep >= 2 grid steps when there is
    # enough work so it can shard across v7x's two TensorCores.
    r_total = _cdiv(n, _LANE)
    tr = min(_TR_MAX, _round_up(r_total, _SUB))
    n_blocks = _cdiv(r_total, tr)
    if n_blocks == 1 and r_total >= 2 * _SUB:
        tr = _round_up(_cdiv(r_total, 2), _SUB)
        n_blocks = _cdiv(r_total, tr)
    r_pad = n_blocks * tr
    n_pad = r_pad * _LANE

    # (N, 4) -> planar (4, R_pad, 128); jnp.pad avoids the zeros+scatter
    # re-materialization of the previous version.
    pred_t = jnp.pad(pred.T, ((0, 0), (0, n_pad - n))).reshape(4, r_pad, _LANE)
    target_t = jnp.pad(target.T, ((0, 0), (0, n_pad - n))).reshape(4, r_pad, _LANE)

    kernel = functools.partial(_iou_loss_kernel, loss_type=loss_type)

    loss_pad = pl.pallas_call(
        kernel,
        out_shape=jax.ShapeDtypeStruct((r_pad, _LANE), jnp.float32),
        grid_spec=pltpu.PrefetchScalarGridSpec(
            num_scalar_prefetch=0,
            grid=(n_blocks,),
            in_specs=[
                pl.BlockSpec((4, tr, _LANE), lambda i: (0, i, 0)),
                pl.BlockSpec((4, tr, _LANE), lambda i: (0, i, 0)),
            ],
            out_specs=pl.BlockSpec((tr, _LANE), lambda i: (i, 0)),
        ),
        compiler_params=pltpu.CompilerParams(
            dimension_semantics=("parallel",),
        ),
    )(pred_t, target_t)

    loss = loss_pad.reshape(-1)[:n]

    if reduction == "mean":
        loss = loss.mean()
    elif reduction == "sum":
        loss = loss.sum()
    return loss


if __name__ == "__main__":
    key = jax.random.PRNGKey(0)

    def make_boxes(k, n):
        k1, k2 = jax.random.split(k)
        return jnp.concatenate(
            [jax.random.uniform(k1, (n, 2)) * 16.0,
             jax.random.uniform(k2, (n, 2)) * 8.0 + 0.5],
            axis=1,
        )

    ok = True
    # n=8 exercises the small-N fast path; n=8400 (YOLOX anchor count)
    # exercises the Pallas kernel (2 planar blocks of 40x128 boxes).
    for n_boxes in (8, 8400):
        kp, kt, key = jax.random.split(key, 3)
        pred = make_boxes(kp, n_boxes)
        target = make_boxes(kt, n_boxes)
        for loss_type in ("iou", "giou"):
            for reduction in ("none", "mean", "sum"):
                out = iou_loss(pred, target, reduction=reduction, loss_type=loss_type)
                out = jax.block_until_ready(out)
                ref = _iou_loss_ref(pred, target, reduction=reduction, loss_type=loss_type)
                if not jnp.allclose(out, ref, atol=1e-5, rtol=1e-5):
                    ok = False

    if ok:
        print("KERNEL_OK")
</pallas_src>

<mosaic_0001>
module attributes {stable_mosaic.version = 11 : i64} {
  func.func @_iou_loss_kernel(%arg0: i32, %arg1: memref<4x40x128xf32, #tpu.memory_space<vmem>>, %arg2: memref<4x40x128xf32, #tpu.memory_space<vmem>>, %arg3: memref<40x128xf32, #tpu.memory_space<vmem>>) attributes {dimension_semantics = [#tpu.dimension_semantics<parallel>], iteration_bounds = array<i64: 2>, scalar_prefetch = 0 : i64, scratch_operands = 0 : i64, tpu.core_type = #tpu.core_type<tc>, window_params = [{transform_indices = @transform_0, window_bounds = array<i64: 4, 40, 128>}, {transform_indices = @transform_1, window_bounds = array<i64: 4, 40, 128>}, {transform_indices = @transform_2, window_bounds = array<i64: 40, 128>}]} {
    %c0 = arith.constant 0 : index
    %c0_0 = arith.constant 0 : index
    %c0_1 = arith.constant 0 : index
    %0 = vector.load %arg1[%c0, %c0_0, %c0_1] : memref<4x40x128xf32, #tpu.memory_space<vmem>>, vector<1x40x128xf32>
    %1 = vector.shape_cast %0 : vector<1x40x128xf32> to vector<40x128xf32>
    %c1 = arith.constant 1 : index
    %c0_2 = arith.constant 0 : index
    %c0_3 = arith.constant 0 : index
    %2 = vector.load %arg1[%c1, %c0_2, %c0_3] : memref<4x40x128xf32, #tpu.memory_space<vmem>>, vector<1x40x128xf32>
    %3 = vector.shape_cast %2 : vector<1x40x128xf32> to vector<40x128xf32>
    %c2 = arith.constant 2 : index
    %c0_4 = arith.constant 0 : index
    %c0_5 = arith.constant 0 : index
    %4 = vector.load %arg1[%c2, %c0_4, %c0_5] : memref<4x40x128xf32, #tpu.memory_space<vmem>>, vector<1x40x128xf32>
    %5 = vector.shape_cast %4 : vector<1x40x128xf32> to vector<40x128xf32>
    %c3 = arith.constant 3 : index
    %c0_6 = arith.constant 0 : index
    %c0_7 = arith.constant 0 : index
    %6 = vector.load %arg1[%c3, %c0_6, %c0_7] : memref<4x40x128xf32, #tpu.memory_space<vmem>>, vector<1x40x128xf32>
    %7 = vector.shape_cast %6 : vector<1x40x128xf32> to vector<40x128xf32>
    %c0_8 = arith.constant 0 : index
    %c0_9 = arith.constant 0 : index
    %c0_10 = arith.constant 0 : index
    %8 = vector.load %arg2[%c0_8, %c0_9, %c0_10] : memref<4x40x128xf32, #tpu.memory_space<vmem>>, vector<1x40x128xf32>
    %9 = vector.shape_cast %8 : vector<1x40x128xf32> to vector<40x128xf32>
    %c1_11 = arith.constant 1 : index
    %c0_12 = arith.constant 0 : index
    %c0_13 = arith.constant 0 : index
    %10 = vector.load %arg2[%c1_11, %c0_12, %c0_13] : memref<4x40x128xf32, #tpu.memory_space<vmem>>, vector<1x40x128xf32>
    %11 = vector.shape_cast %10 : vector<1x40x128xf32> to vector<40x128xf32>
    %c2_14 = arith.constant 2 : index
    %c0_15 = arith.constant 0 : index
    %c0_16 = arith.constant 0 : index
    %12 = vector.load %arg2[%c2_14, %c0_15, %c0_16] : memref<4x40x128xf32, #tpu.memory_space<vmem>>, vector<1x40x128xf32>
    %13 = vector.shape_cast %12 : vector<1x40x128xf32> to vector<40x128xf32>
    %c3_17 = arith.constant 3 : index
    %c0_18 = arith.constant 0 : index
    %c0_19 = arith.constant 0 : index
    %14 = vector.load %arg2[%c3_17, %c0_18, %c0_19] : memref<4x40x128xf32, #tpu.memory_space<vmem>>, vector<1x40x128xf32>
    %15 = vector.shape_cast %14 : vector<1x40x128xf32> to vector<40x128xf32>
    %cst = arith.constant 5.000000e-01 : f32
    %16 = vector.broadcast %cst : f32 to vector<40x128xf32>
    %17 = arith.mulf %5, %16 : vector<40x128xf32>
    %18 = arith.subf %1, %17 : vector<40x128xf32>
    %cst_20 = arith.constant 5.000000e-01 : f32
    %19 = vector.broadcast %cst_20 : f32 to vector<40x128xf32>
    %20 = arith.mulf %5, %19 : vector<40x128xf32>
    %21 = arith.addf %1, %20 : vector<40x128xf32>
    %cst_21 = arith.constant 5.000000e-01 : f32
    %22 = vector.broadcast %cst_21 : f32 to vector<40x128xf32>
    %23 = arith.mulf %7, %22 : vector<40x128xf32>
    %24 = arith.subf %3, %23 : vector<40x128xf32>
    %cst_22 = arith.constant 5.000000e-01 : f32
    %25 = vector.broadcast %cst_22 : f32 to vector<40x128xf32>
    %26 = arith.mulf %7, %25 : vector<40x128xf32>
    %27 = arith.addf %3, %26 : vector<40x128xf32>
    %cst_23 = arith.constant 5.000000e-01 : f32
    %28 = vector.broadcast %cst_23 : f32 to vector<40x128xf32>
    %29 = arith.mulf %13, %28 : vector<40x128xf32>
    %30 = arith.subf %9, %29 : vector<40x128xf32>
    %cst_24 = arith.constant 5.000000e-01 : f32
    %31 = vector.broadcast %cst_24 : f32 to vector<40x128xf32>
    %32 = arith.mulf %13, %31 : vector<40x128xf32>
    %33 = arith.addf %9, %32 : vector<40x128xf32>
    %cst_25 = arith.constant 5.000000e-01 : f32
    %34 = vector.broadcast %cst_25 : f32 to vector<40x128xf32>
    %35 = arith.mulf %15, %34 : vector<40x128xf32>
    %36 = arith.subf %11, %35 : vector<40x128xf32>
    %cst_26 = arith.constant 5.000000e-01 : f32
    %37 = vector.broadcast %cst_26 : f32 to vector<40x128xf32>
    %38 = arith.mulf %15, %37 : vector<40x128xf32>
    %39 = arith.addf %11, %38 : vector<40x128xf32>
    %40 = arith.maximumf %18, %30 : vector<40x128xf32>
    %41 = arith.maximumf %24, %36 : vector<40x128xf32>
    %42 = arith.minimumf %21, %33 : vector<40x128xf32>
    %43 = arith.minimumf %27, %39 : vector<40x128xf32>
    %44 = arith.mulf %5, %7 : vector<40x128xf32>
    %45 = arith.mulf %13, %15 : vector<40x128xf32>
    %46 = arith.cmpf olt, %40, %42 : vector<40x128xf32>
    %47 = arith.cmpf olt, %41, %43 : vector<40x128xf32>
    %48 = arith.andi %46, %47 : vector<40x128xi1>
    %49 = arith.extui %48 : vector<40x128xi1> to vector<40x128xi32>
    %50 = arith.sitofp %49 : vector<40x128xi32> to vector<40x128xf32>
    %51 = arith.subf %42, %40 : vector<40x128xf32>
    %52 = arith.subf %43, %41 : vector<40x128xf32>
    %53 = arith.mulf %51, %52 : vector<40x128xf32>
    %54 = arith.mulf %53, %50 : vector<40x128xf32>
    %55 = arith.addf %44, %45 : vector<40x128xf32>
    %56 = arith.subf %55, %54 : vector<40x128xf32>
    %cst_27 = arith.constant 1.000000e-16 : f32
    %57 = vector.broadcast %cst_27 : f32 to vector<40x128xf32>
    %58 = arith.addf %56, %57 : vector<40x128xf32>
    %59 = arith.divf %54, %58 : vector<40x128xf32>
    %60 = arith.mulf %59, %59 : vector<40x128xf32>
    %cst_28 = arith.constant 1.000000e+00 : f32
    %61 = vector.broadcast %cst_28 : f32 to vector<40x128xf32>
    %62 = arith.subf %61, %60 : vector<40x128xf32>
    %c0_29 = arith.constant 0 : index
    %c0_30 = arith.constant 0 : index
    %63 = vector.load %arg3[%c0_29, %c0_30] : memref<40x128xf32, #tpu.memory_space<vmem>>, vector<40x128xf32>
    tpu.vector_store %arg3[%c0_29, %c0_30], %62 {strides = array<i32>} : memref<40x128xf32, #tpu.memory_space<vmem>>, vector<40x128xf32>,
    return
  }
  func.func @transform_0(%arg0: i32) -> (i32, i32, i32) {
    %c0_i32 = arith.constant 0 : i32
    %c0_i32_0 = arith.constant 0 : i32
    %c0_i32_1 = arith.constant 0 : i32
    return %c0_i32, %arg0, %c0_i32_0 : i32, i32, i32
  }
  func.func @transform_1(%arg0: i32) -> (i32, i32, i32) {
    %c0_i32 = arith.constant 0 : i32
    %c0_i32_0 = arith.constant 0 : i32
    %c0_i32_1 = arith.constant 0 : i32
    return %c0_i32, %arg0, %c0_i32_0 : i32, i32, i32
  }
  func.func @transform_2(%arg0: i32) -> (i32, i32) {
    %c0_i32 = arith.constant 0 : i32
    %c0_i32_0 = arith.constant 0 : i32
    return %arg0, %c0_i32 : i32, i32
  }
}

</mosaic_0001>

<llo_original>
// kernel: tpu_custom_call.1
$region0: #{tpu_custom_call.1}
  #allocation0 [shape = 'u32[]', space=smem, size = 0x4, offset = 0x4, fixed_abs, tag = 'smem constant byte address 0x4 - core index']
  #allocation1 [shape = 'u32[144,128]{1,0:T(1,128)}', space=vmem, size = 0x12000, scoped, tag = 'internal scratch']
  #allocation8 [shape = 's32[]', space=sflag, size = 0x4, offset = 0, fixed_abs, tag = 'sflag constant byte address 0x0 - dummy sync flag']
  #allocation10 [shape = 's32[]', space=sflag, size = 0x4, offset = 0, fixed_abs, tag = 'sflag constant byte address 0x0 - dummy sync flag']
  %s0 = inlined_call_operand.hbm [shape: f32[4,80,128], index: 0, kind: input, shape index: {}]
  %s1 = inlined_call_operand.hbm [shape: f32[4,80,128], index: 1, kind: input, shape index: {}]
  %s2 = inlined_call_operand.hbm [shape: f32[80,128], index: 2, kind: output, shape index: {}]
  %s3 = sld [smem:[#allocation0]]
  $region49: #{tpu_custom_call.1} parent=0
    _
  %s5 = ssub.s32 1, %s3
  %s6 = scalar_select 0, %s5, %s3
  $region1: #{tpu_custom_call.1} parent=0
    #allocation2 [shape = 'u8[163840]{0}', space=vmem, size = 0x28000, scoped, tag = 'input window, operand 0']
    #allocation3 [shape = 's32[2]{0}', space=sflag, size = 0x8, scoped, tag = 'scoped memory for tpu_custom_call.1']
    #allocation4 [shape = 's32[2]{0}', space=sflag, size = 0x8, scoped, tag = 'scoped memory for tpu_custom_call.1']
    #allocation5 [shape = 'u8[163840]{0}', space=vmem, size = 0x28000, scoped, tag = 'input window, operand 1']
    #allocation6 [shape = 's32[2]{0}', space=sflag, size = 0x8, scoped, tag = 'scoped memory for tpu_custom_call.1']
    #allocation7 [shape = 'u8[40960]{0}', space=vmem, size = 0xa000, scoped, tag = 'output window, operand 0']
    %7 = vsyncpa [#allocation3], 0
    %s8 = scalar_lea.sflag [#allocation3], 1
    %9 = vsyncpa %s8, 0
    %10 = vsyncpa [#allocation6], 0
    %s11 = scalar_lea.sflag [#allocation6], 1
    %12 = vsyncpa %s11, 0
    %13 = vsyncpa [#allocation4], 0
    %s14 = scalar_lea.sflag [#allocation4], 1
    %15 = vsyncpa %s14, 0
    loop: start=0, step=1, limit=4
    $region2: #{tpu_custom_call.1} parent=1 // loop_pre_header
      _
    $region3: #{tpu_custom_call.1} parent=1 // loop_header
      %s17 = sphi 0, %s21
      %p18 = scmp.ge.s32.totalorder %s17, 4
      %s27 = sphi 0, %s29
      %s30 = sphi 0, %s27
      %s31 = sphi 0, %s30
      %s47 = sphi 0, %s31
      %s53 = sphi 0, %s55
      %s56 = sphi 0, %s53
      %s57 = sphi 0, %s56
      %s73 = sphi 0, %s57
      %s79 = sphi 0, %s81
      %s82 = sphi 0, %s79
      %s83 = sphi 0, %s82
      %s99 = sphi 0, %s83
    $region4: #{tpu_custom_call.1} parent=1 // loop_header_branch
      %20 = sbr.rel (%p18) target = $region8
    $region5: #{tpu_custom_call.1} parent=1 // loop_body
      %s22 = ssub.s32 %s17, 1
      %s23 = ssub.s32 %s17, 2
      %s24 = sadd.s32 %s17, 1
      %s25 = ssub.s32 %s17, %s24
      %p26 = scmp.eq.s32.totalorder %s25, 0
      %s28 = sadd.s32 %s27, 1
      %s29 = scalar_select %p26, %s27, %s28
      %p32 = pneg %p26
      %p33 = scmp.eq.s32.totalorder %s17, 1
      %p34 = por %p32, %p33
      %p35 = scmp.ne.s32.totalorder %s27, %s30
      %p36 = scmp.eq.s32.totalorder %s17, 0
      %p37 = por %p35, %p36
      %p38 = scmp.ne.s32.totalorder %s27, %s30
      %p39 = scmp.eq.s32.totalorder %s22, 1
      %p40 = por %p38, %p39
      %p41 = scmp.ne.s32.totalorder %s30, %s31
      %p42 = scmp.eq.s32.totalorder %s22, 0
      %p43 = por %p41, %p42
      %p44 = scmp.ne.s32.totalorder %s30, %s31
      %p45 = scmp.eq.s32.totalorder %s23, 1
      %p46 = por %p44, %p45
      %p48 = scmp.ne.s32.totalorder %s31, %s47
      %p49 = scmp.eq.s32.totalorder %s23, 0
      %p50 = por %p48, %p49
      %s51 = ssub.s32 %s17, %s24
      %p52 = scmp.eq.s32.totalorder %s51, 0
      %s54 = sadd.s32 %s53, 1
      %s55 = scalar_select %p52, %s53, %s54
      %p58 = pneg %p52
      %p59 = scmp.eq.s32.totalorder %s17, 1
      %p60 = por %p58, %p59
      %p61 = scmp.ne.s32.totalorder %s53, %s56
      %p62 = scmp.eq.s32.totalorder %s17, 0
      %p63 = por %p61, %p62
      %p64 = scmp.ne.s32.totalorder %s53, %s56
      %p65 = scmp.eq.s32.totalorder %s22, 1
      %p66 = por %p64, %p65
      %p67 = scmp.ne.s32.totalorder %s56, %s57
      %p68 = scmp.eq.s32.totalorder %s22, 0
      %p69 = por %p67, %p68
      %p70 = scmp.ne.s32.totalorder %s56, %s57
      %p71 = scmp.eq.s32.totalorder %s23, 1
      %p72 = por %p70, %p71
      %p74 = scmp.ne.s32.totalorder %s57, %s73
      %p75 = scmp.eq.s32.totalorder %s23, 0
      %p76 = por %p74, %p75
      %s77 = ssub.s32 %s17, %s24
      %p78 = scmp.eq.s32.totalorder %s77, 0
      %s80 = sadd.s32 %s79, 1
      %s81 = scalar_select %p78, %s79, %s80
      %p84 = pneg %p78
      %p85 = scmp.eq.s32.totalorder %s17, 1
      %p86 = por %p84, %p85
      %p87 = scmp.ne.s32.totalorder %s79, %s82
      %p88 = scmp.eq.s32.totalorder %s17, 0
      %p89 = por %p87, %p88
      %p90 = scmp.ne.s32.totalorder %s79, %s82
      %p91 = scmp.eq.s32.totalorder %s22, 1
      %p92 = por %p90, %p91
      %p93 = scmp.ne.s32.totalorder %s82, %s83
      %p94 = scmp.eq.s32.totalorder %s22, 0
      %p95 = por %p93, %p94
      %p96 = scmp.ne.s32.totalorder %s82, %s83
      %p97 = scmp.eq.s32.totalorder %s23, 1
      %p98 = por %p96, %p97
      %p100 = scmp.ne.s32.totalorder %s83, %s99
      %p101 = scmp.eq.s32.totalorder %s23, 0
      %p102 = por %p100, %p101
      %p103 = scmp.le.s32.totalorder 1, %s17
      %p104 = scmp.lt.s32.totalorder %s17, 3
      %p105 = pnand %p103, %p104
      %p106 = pneg %p105
      // Predicated region
      $region9: #{tpu_custom_call.1} parent=5 // pred_check
        _
      $region10: #{tpu_custom_call.1} parent=5 // pred_check_branch
        %108 = sbr.rel (%p105) target = $region12
      $region11: #{tpu_custom_call.1} parent=5 // pred_region
        %s109 = ssub.s32 %s17, 1
      $region12: #{tpu_custom_call.1} parent=5 // pred_fallthru
        _
      %p110 = scmp.lt.s32.totalorder %s17, 2
      // Predicated region
      $region13: #{tpu_custom_call.1} parent=5 // pred_check
        %p111 = pneg %p110
      $region14: #{tpu_custom_call.1} parent=5 // pred_check_branch
        %113 = sbr.rel (%p111) target = $region16
      $region15: #{tpu_custom_call.1} parent=5 // pred_region
        // Predicated region
        $region17: #{tpu_custom_call.1} parent=15 // pred_check
          %p114 = pneg %p37
        $region18: #{tpu_custom_call.1} parent=15 // pred_check_branch
          %116 = sbr.rel (%p114) target = $region20
        $region19: #{tpu_custom_call.1} parent=15 // pred_region
          #allocation9 [shape = 'u32[6]{0}', space=smem, size = 0x18, scoped, tag = 'DMA stride descriptor']
          %s117 = sand.u32 %s27, 1
          %s118 = scalar_lea.sflag [#allocation3], %s117
          %s119 = sand.u32 %s27, 1
          %s120 = smul.addr %s119, 160
          %s121 = scalar_lea.vmem [#allocation2], %s120
          %s122 = smul.u32 5, %s17
          %s124 = ssub.s32 2560, 2560
          %125 = vsyncadd %s118, %s124
          %s126 = smul.addr %s122, 128
          %s127 = scalar_lea.hbm %s0, %s126
          %s129 = sshll.u32 1, 14
          %s130 = sxor.u32 4294967295, %s129
          %s132 = sld [smem:[#allocation0]]
          %s133 = sadd.s32 2, %s132
          %s135 = sshll.u32 7, 26
          %s136 = sxor.u32 4294967295, %s135
          %s137 = sand.u32 0, %s136
          %s138 = sshll.u32 %s133, 26
          %s139 = sor.u32 %s137, %s138
          %s140 = sshll.u32 %s121, 4
          %s141 = int_to_ptr.vmem [resolvable:$true] %s140
          %147 = sst [smem:[#allocation9]] 1280
          %s148 = scalar_lea.smem [#allocation9], 1
          %149 = sst [smem:[%s148]] 640
          %s150 = scalar_lea.smem [#allocation9], 2
          %151 = sst [smem:[%s150]] 5
          %s152 = scalar_lea.smem [#allocation9], 3
          %153 = sst [smem:[%s152]] 128
          %s154 = scalar_lea.smem [#allocation9], 4
          %155 = sst [smem:[%s154]] 128
          %s156 = scalar_lea.smem [#allocation9], 5
          %157 = sst [smem:[%s156]] 8
          %159 = dma.general %s127, 2560, %s141, %s118, [#allocation8], [#allocation9], %s139, 0
        $region20: #{tpu_custom_call.1} parent=15 // pred_fallthru
          _
        // Predicated region
        $region21: #{tpu_custom_call.1} parent=15 // pred_check
          %p160 = pneg %p63
        $region22: #{tpu_custom_call.1} parent=15 // pred_check_branch
          %162 = sbr.rel (%p160) target = $region24
        $region23: #{tpu_custom_call.1} parent=15 // pred_region
          #allocation11 [shape = 'u32[6]{0}', space=smem, size = 0x18, scoped, tag = 'DMA stride descriptor']
          %s163 = sand.u32 %s53, 1
          %s164 = scalar_lea.sflag [#allocation6], %s163
          %s165 = sand.u32 %s53, 1
          %s166 = smul.addr %s165, 160
          %s167 = scalar_lea.vmem [#allocation5], %s166
          %s168 = smul.u32 5, %s17
          %s170 = ssub.s32 2560, 2560
          %171 = vsyncadd %s164, %s170
          %s172 = smul.addr %s168, 128
          %s173 = scalar_lea.hbm %s1, %s172
          %s175 = sshll.u32 1, 14
          %s176 = sxor.u32 4294967295, %s175
          %s178 = sld [smem:[#allocation0]]
          %s179 = sadd.s32 2, %s178
          %s181 = sshll.u32 7, 26
          %s182 = sxor.u32 4294967295, %s181
          %s183 = sand.u32 0, %s182
          %s184 = sshll.u32 %s179, 26
          %s185 = sor.u32 %s183, %s184
          %s186 = sshll.u32 %s167, 4
          %s187 = int_to_ptr.vmem [resolvable:$true] %s186
          %193 = sst [smem:[#allocation11]] 1280
          %s194 = scalar_lea.smem [#allocation11], 1
          %195 = sst [smem:[%s194]] 640
          %s196 = scalar_lea.smem [#allocation11], 2
          %197 = sst [smem:[%s196]] 5
          %s198 = scalar_lea.smem [#allocation11], 3
          %199 = sst [smem:[%s198]] 128
          %s200 = scalar_lea.smem [#allocation11], 4
          %201 = sst [smem:[%s200]] 128
          %s202 = scalar_lea.smem [#allocation11], 5
          %203 = sst [smem:[%s202]] 8
          %205 = dma.general %s173, 2560, %s187, %s164, [#allocation10], [#allocation11], %s185, 0
        $region24: #{tpu_custom_call.1} parent=15 // pred_fallthru
          _
      $region16: #{tpu_custom_call.1} parent=5 // pred_fallthru
        _
      %p206 = scmp.le.s32.totalorder 1, %s17
      %p207 = scmp.lt.s32.totalorder %s17, 3
      %p208 = pnand %p206, %p207
      %p209 = pneg %p208
      // Predicated region
      $region25: #{tpu_custom_call.1} parent=5 // pred_check
        _
      $region26: #{tpu_custom_call.1} parent=5 // pred_check_branch
        %211 = sbr.rel (%p208) target = $region28
      $region27: #{tpu_custom_call.1} parent=5 // pred_region
        %s212 = ssub.s32 %s17, 1
        %s213 = sand.u32 %s30, 1
        %s214 = scalar_lea.sflag [#allocation3], %s213
        %s215 = sand.u32 %s30, 1
        %s216 = smul.addr %s215, 160
        %s217 = scalar_lea.vmem [#allocation2], %s216
        // Predicated region
        $region29: #{tpu_custom_call.1} parent=27 // pred_check
          %p218 = pneg %p43
        $region30: #{tpu_custom_call.1} parent=27 // pred_check_branch
          %220 = sbr.rel (%p218) target = $region32
        $region31: #{tpu_custom_call.1} parent=27 // pred_region
          %221 = dma.done %s214, 2560
        $region32: #{tpu_custom_call.1} parent=27 // pred_fallthru
          _
        %s222 = sand.u32 %s56, 1
        %s223 = scalar_lea.sflag [#allocation6], %s222
        %s224 = sand.u32 %s56, 1
        %s225 = smul.addr %s224, 160
        %s226 = scalar_lea.vmem [#allocation5], %s225
        // Predicated region
        $region33: #{tpu_custom_call.1} parent=27 // pred_check
          %p227 = pneg %p69
        $region34: #{tpu_custom_call.1} parent=27 // pred_check_branch
          %229 = sbr.rel (%p227) target = $region36
        $region35: #{tpu_custom_call.1} parent=27 // pred_region
          %230 = dma.done %s223, 2560
        $region36: #{tpu_custom_call.1} parent=27 // pred_fallthru
          _
        %s231 = sand.u32 %s30, 1
        %s232 = scalar_lea.sflag [#allocation3], %s231
        %s233 = sand.u32 %s30, 1
        %s234 = smul.addr %s233, 160
        %s235 = scalar_lea.vmem [#allocation2], %s234
        %p236 = pneg %p43
        %p237 = pneg %p40
        %s238 = sand.u32 %s56, 1
        %s239 = scalar_lea.sflag [#allocation6], %s238
        %s240 = sand.u32 %s56, 1
        %s241 = smul.addr %s240, 160
        %s242 = scalar_lea.vmem [#allocation5], %s241
        %p243 = pneg %p69
        %p244 = pneg %p66
        %p245 = pneg %p95
        %p246 = pneg %p92
        %s247 = sand.u32 %s82, 1
        %s248 = scalar_lea.sflag [#allocation4], %s247
        %s249 = sand.u32 %s82, 1
        %s250 = smul.addr %s249, 40
        %s251 = scalar_lea.vmem [#allocation7], %s250
        %s252 = smul.u32 5, %s22
        %s253 = smul.u32 5, %s22
        %s254 = smul.u32 5, %s22
        %v255 = vld [vmem:[%s217] sm:$0xff]
        %v256 = vld [vmem:[%s217 + $0x8] sm:$0xff]
        %v257 = vld [vmem:[%s217 + $0x10] sm:$0xff]
        %v258 = vld [vmem:[%s217 + $0x18] sm:$0xff]
        %v259 = vld [vmem:[%s217 + $0x20] sm:$0xff]
        %s260 = scalar_lea.vmem %s217, 40 [#allocation2]
        %v261 = vld [vmem:[%s260] sm:$0xff]
        %v262 = vld [vmem:[%s260 + $0x8] sm:$0xff]
        %v263 = vld [vmem:[%s260 + $0x10] sm:$0xff]
        %v264 = vld [vmem:[%s260 + $0x18] sm:$0xff]
        %v265 = vld [vmem:[%s260 + $0x20] sm:$0xff]
        %s266 = scalar_lea.vmem %s217, 80 [#allocation2]
        %v267 = vld [vmem:[%s266] sm:$0xff]
        %v268 = vld [vmem:[%s266 + $0x8] sm:$0xff]
        %v269 = vld [vmem:[%s266 + $0x10] sm:$0xff]
        %v270 = vld [vmem:[%s266 + $0x18] sm:$0xff]
        %v271 = vld [vmem:[%s266 + $0x20] sm:$0xff]
        %s272 = scalar_lea.vmem %s217, 120 [#allocation2]
        %v273 = vld [vmem:[%s272] sm:$0xff]
        %v274 = vld [vmem:[%s272 + $0x8] sm:$0xff]
        %v275 = vld [vmem:[%s272 + $0x10] sm:$0xff]
        %v276 = vld [vmem:[%s272 + $0x18] sm:$0xff]
        %v277 = vld [vmem:[%s272 + $0x20] sm:$0xff]
        %v278 = vld [vmem:[%s226] sm:$0xff]
        %v279 = vld [vmem:[%s226 + $0x8] sm:$0xff]
        %v280 = vld [vmem:[%s226 + $0x10] sm:$0xff]
        %v281 = vld [vmem:[%s226 + $0x18] sm:$0xff]
        %v282 = vld [vmem:[%s226 + $0x20] sm:$0xff]
        %s283 = scalar_lea.vmem %s226, 40 [#allocation5]
        %v284 = vld [vmem:[%s283] sm:$0xff]
        %v285 = vld [vmem:[%s283 + $0x8] sm:$0xff]
        %v286 = vld [vmem:[%s283 + $0x10] sm:$0xff]
        %v287 = vld [vmem:[%s283 + $0x18] sm:$0xff]
        %v288 = vld [vmem:[%s283 + $0x20] sm:$0xff]
        %s289 = scalar_lea.vmem %s226, 80 [#allocation5]
        %v290 = vld [vmem:[%s289] sm:$0xff]
        %v291 = vld [vmem:[%s289 + $0x8] sm:$0xff]
        %v292 = vld [vmem:[%s289 + $0x10] sm:$0xff]
        %v293 = vld [vmem:[%s289 + $0x18] sm:$0xff]
        %v294 = vld [vmem:[%s289 + $0x20] sm:$0xff]
        %s295 = scalar_lea.vmem %s226, 120 [#allocation5]
        %v296 = vld [vmem:[%s295] sm:$0xff]
        %v297 = vld [vmem:[%s295 + $0x8] sm:$0xff]
        %v298 = vld [vmem:[%s295 + $0x10] sm:$0xff]
        %v299 = vld [vmem:[%s295 + $0x18] sm:$0xff]
        %v300 = vld [vmem:[%s295 + $0x20] sm:$0xff]
        %v301 = vmul.f32 %v267, 0.5
        %v302 = vmul.f32 %v268, 0.5
        %v303 = vmul.f32 %v269, 0.5
        %v304 = vmul.f32 %v270, 0.5
        %v305 = vmul.f32 %v271, 0.5
        %v306 = vsub.f32 %v255, %v301
        %v307 = vsub.f32 %v256, %v302
        %v308 = vsub.f32 %v257, %v303
        %v309 = vsub.f32 %v258, %v304
        %v310 = vsub.f32 %v259, %v305
        %v311 = vadd.f32 %v255, %v301
        %v312 = vadd.f32 %v256, %v302
        %v313 = vadd.f32 %v257, %v303
        %v314 = vadd.f32 %v258, %v304
        %v315 = vadd.f32 %v259, %v305
        %v316 = vmul.f32 %v273, 0.5
        %v317 = vmul.f32 %v274, 0.5
        %v318 = vmul.f32 %v275, 0.5
        %v319 = vmul.f32 %v276, 0.5
        %v320 = vmul.f32 %v277, 0.5
        %v321 = vsub.f32 %v261, %v316
        %v322 = vsub.f32 %v262, %v317
        %v323 = vsub.f32 %v263, %v318
        %v324 = vsub.f32 %v264, %v319
        %v325 = vsub.f32 %v265, %v320
        %v326 = vadd.f32 %v261, %v316
        %v327 = vadd.f32 %v262, %v317
        %v328 = vadd.f32 %v263, %v318
        %v329 = vadd.f32 %v264, %v319
        %v330 = vadd.f32 %v265, %v320
        %v331 = vmul.f32 %v290, 0.5
        %v332 = vmul.f32 %v291, 0.5
        %v333 = vmul.f32 %v292, 0.5
        %v334 = vmul.f32 %v293, 0.5
        %v335 = vmul.f32 %v294, 0.5
        %v336 = vsub.f32 %v278, %v331
        %v337 = vsub.f32 %v279, %v332
        %v338 = vsub.f32 %v280, %v333
        %v339 = vsub.f32 %v281, %v334
        %v340 = vsub.f32 %v282, %v335
        %v341 = vadd.f32 %v278, %v331
        %v342 = vadd.f32 %v279, %v332
        %v343 = vadd.f32 %v280, %v333
        %v344 = vadd.f32 %v281, %v334
        %v345 = vadd.f32 %v282, %v335
        %v346 = vmul.f32 %v296, 0.5
        %v347 = vmul.f32 %v297, 0.5
        %v348 = vmul.f32 %v298, 0.5
        %v349 = vmul.f32 %v299, 0.5
        %v350 = vmul.f32 %v300, 0.5
        %v351 = vsub.f32 %v284, %v346
        %v352 = vsub.f32 %v285, %v347
        %v353 = vsub.f32 %v286, %v348
        %v354 = vsub.f32 %v287, %v349
        %v355 = vsub.f32 %v288, %v350
        %v356 = vadd.f32 %v284, %v346
        %v357 = vadd.f32 %v285, %v347
        %v358 = vadd.f32 %v286, %v348
        %v359 = vadd.f32 %v287, %v349
        %v360 = vadd.f32 %v288, %v350
        %v361 = vmax.f32 %v306, %v336
        %v362 = vmax.f32 %v307, %v337
        %v363 = vmax.f32 %v308, %v338
        %v364 = vmax.f32 %v309, %v339
        %v365 = vmax.f32 %v310, %v340
        %v366 = vmax.f32 %v321, %v351
        %v367 = vmax.f32 %v322, %v352
        %v368 = vmax.f32 %v323, %v353
        %v369 = vmax.f32 %v324, %v354
        %v370 = vmax.f32 %v325, %v355
        %v371 = vmin.f32 %v311, %v341
        %v372 = vmin.f32 %v312, %v342
        %v373 = vmin.f32 %v313, %v343
        %v374 = vmin.f32 %v314, %v344
        %v375 = vmin.f32 %v315, %v345
        %v376 = vmin.f32 %v326, %v356
        %v377 = vmin.f32 %v327, %v357
        %v378 = vmin.f32 %v328, %v358
        %v379 = vmin.f32 %v329, %v359
        %v380 = vmin.f32 %v330, %v360
        %v381 = vmul.f32 %v267, %v273
        %v382 = vmul.f32 %v268, %v274
        %v383 = vmul.f32 %v269, %v275
        %v384 = vmul.f32 %v270, %v276
        %v385 = vmul.f32 %v271, %v277
        %v386 = vmul.f32 %v290, %v296
        %v387 = vmul.f32 %v291, %v297
        %v388 = vmul.f32 %v292, %v298
        %v389 = vmul.f32 %v293, %v299
        %v390 = vmul.f32 %v294, %v300
        %vm391 = vcmp.lt.f32.partialorder %v361, %v371
        %vm392 = vcmp.lt.f32.partialorder %v362, %v372
        %vm393 = vcmp.lt.f32.partialorder %v363, %v373
        %vm394 = vcmp.lt.f32.partialorder %v364, %v374
        %vm395 = vcmp.lt.f32.partialorder %v365, %v375
        %vm396 = vcmp.lt.f32.partialorder %v366, %v376
        %vm397 = vcmp.lt.f32.partialorder %v367, %v377
        %vm398 = vcmp.lt.f32.partialorder %v368, %v378
        %vm399 = vcmp.lt.f32.partialorder %v369, %v379
        %vm400 = vcmp.lt.f32.partialorder %v370, %v380
        %vm401 = vmand %vm391, %vm396
        %vm402 = vmand %vm392, %vm397
        %vm403 = vmand %vm393, %vm398
        %vm404 = vmand %vm394, %vm399
        %vm405 = vmand %vm395, %vm400
        %v406 = vsel %vm401, 1, 0
        %v407 = vsel %vm402, 1, 0
        %v408 = vsel %vm403, 1, 0
        %v409 = vsel %vm404, 1, 0
        %v410 = vsel %vm405, 1, 0
        %v411 = vcvt.s32.f32 %v406
        %v412 = vcvt.s32.f32 %v407
        %v413 = vcvt.s32.f32 %v408
        %v414 = vcvt.s32.f32 %v409
        %v415 = vcvt.s32.f32 %v410
        %v416 = vsub.f32 %v371, %v361
        %v417 = vsub.f32 %v372, %v362
        %v418 = vsub.f32 %v373, %v363
        %v419 = vsub.f32 %v374, %v364
        %v420 = vsub.f32 %v375, %v365
        %v421 = vsub.f32 %v376, %v366
        %v422 = vsub.f32 %v377, %v367
        %v423 = vsub.f32 %v378, %v368
        %v424 = vsub.f32 %v379, %v369
        %v425 = vsub.f32 %v380, %v370
        %v426 = vmul.f32 %v416, %v421
        %v427 = vmul.f32 %v417, %v422
        %v428 = vmul.f32 %v418, %v423
        %v429 = vmul.f32 %v419, %v424
        %v430 = vmul.f32 %v420, %v425
        %v431 = vmul.f32 %v426, %v411
        %v432 = vmul.f32 %v427, %v412
        %v433 = vmul.f32 %v428, %v413
        %v434 = vmul.f32 %v429, %v414
        %v435 = vmul.f32 %v430, %v415
        %v436 = vadd.f32 %v381, %v386
        %v437 = vadd.f32 %v382, %v387
        %v438 = vadd.f32 %v383, %v388
        %v439 = vadd.f32 %v384, %v389
        %v440 = vadd.f32 %v385, %v390
        %v441 = vsub.f32 %v436, %v431
        %v442 = vsub.f32 %v437, %v432
        %v443 = vsub.f32 %v438, %v433
        %v444 = vsub.f32 %v439, %v434
        %v445 = vsub.f32 %v440, %v435
        %v446 = vadd.f32 %v441, 1e-16
        %v447 = vadd.f32 %v442, 1e-16
        %v448 = vadd.f32 %v443, 1e-16
        %v449 = vadd.f32 %v444, 1e-16
        %v450 = vadd.f32 %v445, 1e-16
        %v451 = vrcp.pop %v446
        %v452 = vmul.f32 %v431, %v451
        %v453 = vrcp.pop %v447
        %v454 = vmul.f32 %v432, %v453
        %v455 = vrcp.pop %v448
        %v456 = vmul.f32 %v433, %v455
        %v457 = vrcp.pop %v449
        %v458 = vmul.f32 %v434, %v457
        %v459 = vrcp.pop %v450
        %v460 = vmul.f32 %v435, %v459
        %v461 = vmul.f32 %v452, %v452
        %v462 = vmul.f32 %v454, %v454
        %v463 = vmul.f32 %v456, %v456
        %v464 = vmul.f32 %v458, %v458
        %v465 = vmul.f32 %v460, %v460
        %v466 = vsub.f32 1.0, %v461
        %v467 = vsub.f32 1.0, %v462
        %v468 = vsub.f32 1.0, %v463
        %v469 = vsub.f32 1.0, %v464
        %v470 = vsub.f32 1.0, %v465
        %471 = vst [vmem:[%s251] sm:$0xff] %v466
        %472 = vst [vmem:[%s251 + $0x8] sm:$0xff] %v467
        %473 = vst [vmem:[%s251 + $0x10] sm:$0xff] %v468
        %474 = vst [vmem:[%s251 + $0x18] sm:$0xff] %v469
        %475 = vst [vmem:[%s251 + $0x20] sm:$0xff] %v470
        %s476 = sand.u32 %s82, 1
        %s477 = scalar_lea.sflag [#allocation4], %s476
        %s478 = sand.u32 %s82, 1
        %s479 = smul.addr %s478, 40
        %s480 = scalar_lea.vmem [#allocation7], %s479
        // Predicated region
        $region37: #{tpu_custom_call.1} parent=27 // pred_check
          %p481 = pneg %p92
        $region38: #{tpu_custom_call.1} parent=27 // pred_check_branch
          %483 = sbr.rel (%p481) target = $region40
        $region39: #{tpu_custom_call.1} parent=27 // pred_region
          %s484 = smul.u32 5, %s22
          %s486 = ssub.s32 640, 640
          %487 = vsyncadd %s477, %s486
          %s488 = smul.addr %s484, 128
          %s489 = scalar_lea.hbm %s2, %s488
          %s490 = sshll.u32 %s480, 4
          %s491 = int_to_ptr.vmem [resolvable:$true] %s490
          %496 = dma.vmem_to_hbm [thread:$0]  %s491, 640, %s489, %s477, 128, 128, 8
        $region40: #{tpu_custom_call.1} parent=27 // pred_fallthru
          _
      $region28: #{tpu_custom_call.1} parent=5 // pred_fallthru
        _
      %p497 = scmp.le.s32.totalorder 2, %s17
      // Predicated region
      $region41: #{tpu_custom_call.1} parent=5 // pred_check
        %p498 = pneg %p497
      $region42: #{tpu_custom_call.1} parent=5 // pred_check_branch
        %500 = sbr.rel (%p498) target = $region44
      $region43: #{tpu_custom_call.1} parent=5 // pred_region
        %s501 = ssub.s32 %s17, 2
        // Predicated region
        $region45: #{tpu_custom_call.1} parent=43 // pred_check
          %p502 = pneg %p98
        $region46: #{tpu_custom_call.1} parent=43 // pred_check_branch
          %504 = sbr.rel (%p502) target = $region48
        $region47: #{tpu_custom_call.1} parent=43 // pred_region
          %s505 = sand.u32 %s83, 1
          %s506 = scalar_lea.sflag [#allocation4], %s505
          %s507 = sand.u32 %s83, 1
          %s508 = smul.addr %s507, 40
          %s509 = scalar_lea.vmem [#allocation7], %s508
          %510 = dma.done %s506, 640
        $region48: #{tpu_custom_call.1} parent=43 // pred_fallthru
          _
      $region44: #{tpu_custom_call.1} parent=5 // pred_fallthru
        _
    $region6: #{tpu_custom_call.1} parent=1 // loop_footer
      %s21 = sadd.s32 1, %s17
    $region7: #{tpu_custom_call.1} parent=1 // loop_footer_branch
      %16 = sbr.rel target = $region3
    $region8: #{tpu_custom_call.1} parent=1 // loop_exit
      _
    %511 = vsyncpa [#allocation3], 1
    %s512 = scalar_lea.sflag [#allocation3], 1
    %513 = vsyncpa %s512, 1
    %514 = vsyncpa [#allocation6], 1
    %s515 = scalar_lea.sflag [#allocation6], 1
    %516 = vsyncpa %s515, 1
    %517 = vsyncpa [#allocation4], 1
    %s518 = scalar_lea.sflag [#allocation4], 1
    %519 = vsyncpa %s518, 1

</llo_original>
